<compile_context>
chip_gen: v7x
topology: tpu7x:2x2x1
jax: 0.10.0
libtpu: 0.0.40
codegen_flags: <defaults>
</compile_context>

<pallas_src>
import jax
import jax.numpy as jnp
from jax.experimental import pallas as pl
from jax.experimental.pallas import tpu as pltpu


def _rigged_forward_kernel(out_const_ref, o_ref):
    """Entire forward of RiggedModel: emit the stored output tensor.

    One whole-block VMEM load and one whole-block lane-dense VMEM store.
    """
    o_ref[...] = out_const_ref[...]


def rigged_model_forward(x, rigged_output):
    """Pallas equivalent of RiggedModel.forward(x) -> self.output.

    `x` is accepted to mirror the PyTorch signature but is ignored, exactly as
    in the reference module.
    """
    del x  # forward ignores its input by construction
    nbytes = rigged_output.size * rigged_output.dtype.itemsize
    return pl.pallas_call(
        _rigged_forward_kernel,
        out_shape=jax.ShapeDtypeStruct(rigged_output.shape, rigged_output.dtype),
        # Full-array blocks in VMEM (full dims are exempt from (8,128) rule).
        in_specs=[
            pl.BlockSpec(
                rigged_output.shape,
                lambda: (0, 0),
                memory_space=pltpu.VMEM,
            )
        ],
        out_specs=pl.BlockSpec(
            rigged_output.shape,
            lambda: (0, 0),
            memory_space=pltpu.VMEM,
        ),
        # Honest hint: zero flops, one read + one write of the 2x62 tensor.
        cost_estimate=pl.CostEstimate(
            flops=0, transcendentals=0, bytes_accessed=2 * nbytes
        ),
        # Tiny scoped-VMEM cap: do not reserve the default budget (matters most
        # on v7x with only 64 MiB VMEM per TensorCore).
        compiler_params=pltpu.CompilerParams(vmem_limit_bytes=1 << 20),
    )(rigged_output)


if __name__ == "__main__":
    key = jax.random.PRNGKey(0)
    k_out, k_x = jax.random.split(key)

    batch = 2
    in_features = 330
    out_features = 62

    # The rigged output the module was constructed with.
    rigged_output = jax.random.normal(k_out, (batch, out_features), dtype=jnp.float32)
    # An input, which the forward pass ignores (shape matches Linear(330, 62)).
    x = jax.random.normal(k_x, (batch, in_features), dtype=jnp.float32)

    # TODO(synk): DummyModel.layer_1 (Linear(330, 62)) parameters are dead code
    # in RiggedModel.forward; per the perf review they are never created or
    # transferred to device.

    y = jax.block_until_ready(rigged_model_forward(x, rigged_output))

    # Verify exact semantics: forward(x) == self.output, independent of x.
    assert y.shape == (batch, out_features), y.shape
    assert y.dtype == jnp.float32, y.dtype
    assert bool(jnp.array_equal(y, rigged_output)), "forward must return self.output"

    # Input-independence: a different x yields the identical output.
    y2 = jax.block_until_ready(rigged_model_forward(jnp.zeros_like(x), rigged_output))
    assert bool(jnp.array_equal(y2, rigged_output))

    print("KERNEL_OK")
</pallas_src>

<mosaic_0001>
module attributes {stable_mosaic.version = 11 : i64} {
  func.func @_rigged_forward_kernel(%arg0: memref<2x62xf32, #tpu.memory_space<vmem>>, %arg1: memref<2x62xf32, #tpu.memory_space<vmem>>) attributes {dimension_semantics = [], scalar_prefetch = 0 : i64, scratch_operands = 0 : i64, tpu.core_type = #tpu.core_type<tc>} {
    %c0 = arith.constant 0 : index
    %c0_0 = arith.constant 0 : index
    %0 = vector.load %arg0[%c0, %c0_0] : memref<2x62xf32, #tpu.memory_space<vmem>>, vector<2x62xf32>
    %c0_1 = arith.constant 0 : index
    %c0_2 = arith.constant 0 : index
    %1 = vector.load %arg1[%c0_1, %c0_2] : memref<2x62xf32, #tpu.memory_space<vmem>>, vector<2x62xf32>
    tpu.vector_store %arg1[%c0_1, %c0_2], %0 {strides = array<i32>} : memref<2x62xf32, #tpu.memory_space<vmem>>, vector<2x62xf32>,
    return
  }
}

</mosaic_0001>

<llo_original>
// kernel: tpu_custom_call.1
$region0: #{tpu_custom_call.1}
  #allocation0 [shape = 'u32[]', space=smem, size = 0x4, offset = 0x4, fixed_abs, tag = 'smem constant byte address 0x4 - core index']
  #allocation1 [shape = 'u32[144,128]{1,0:T(1,128)}', space=vmem, size = 0x12000, scoped, tag = 'internal scratch']
  %s0 = inlined_call_operand.hbm [shape: f32[2,62], index: 0, kind: input, shape index: {}]
  %s1 = inlined_call_operand.hbm [shape: f32[2,62], index: 1, kind: output, shape index: {}]
  %s2 = sld [smem:[#allocation0]]
  $region18: #{tpu_custom_call.1} parent=0
    _
  %s4 = ssub.s32 1, %s2
  %s5 = scalar_select 0, %s4, %s2
  $region1: #{tpu_custom_call.1} parent=0
    #allocation2 [shape = 'u8[1024]{0}', space=vmem, size = 0x400, scoped, tag = 'input window, operand 0, single buffered']
    #allocation3 [shape = 's32[1]{0}', space=sflag, size = 0x4, scoped, tag = 'scoped memory for tpu_custom_call.1']
    #allocation4 [shape = 's32[1]{0}', space=sflag, size = 0x4, scoped, tag = 'scoped memory for tpu_custom_call.1']
    #allocation5 [shape = 'u8[1024]{0}', space=vmem, size = 0x400, scoped, tag = 'output window, operand 0, single buffered']
    %6 = vsyncpa [#allocation3], 0
    %7 = vsyncpa [#allocation4], 0
    // Predicated region
    $region2: #{tpu_custom_call.1} parent=1 // pred_check
      _
    $region3: #{tpu_custom_call.1} parent=1 // pred_check_branch
      %9 = sbr.rel (0) target = $region5
    $region4: #{tpu_custom_call.1} parent=1 // pred_region
      %s11 = ssub.s32 32, 32
      %12 = vsyncadd [#allocation3], %s11
      %s14 = sshll.u32 [#allocation2], 4
      %s15 = int_to_ptr.vmem [resolvable:$true] %s14
      %17 = dma.hbm_to_vmem [thread:$0]  %s0, 32, %s15, [#allocation3]
    $region5: #{tpu_custom_call.1} parent=1 // pred_fallthru
      _
    // Predicated region
    $region6: #{tpu_custom_call.1} parent=1 // pred_check
      _
    $region7: #{tpu_custom_call.1} parent=1 // pred_check_branch
      %19 = sbr.rel (0) target = $region9
    $region8: #{tpu_custom_call.1} parent=1 // pred_region
      %20 = dma.done [#allocation3], 32
    $region9: #{tpu_custom_call.1} parent=1 // pred_fallthru
      _
    %v21 = vld [vmem:[#allocation2] sm:$0x3]
    %vm22 = vcmask 500736
    %23 = vst.msk [vmem:[#allocation5] sm:$0x3] %vm22, %v21
    // Predicated region
    $region10: #{tpu_custom_call.1} parent=1 // pred_check
      _
    $region11: #{tpu_custom_call.1} parent=1 // pred_check_branch
      %25 = sbr.rel (0) target = $region13
    $region12: #{tpu_custom_call.1} parent=1 // pred_region
      %s27 = ssub.s32 32, 32
      %28 = vsyncadd [#allocation4], %s27
      %s30 = sshll.u32 [#allocation5], 4
      %s31 = int_to_ptr.vmem [resolvable:$true] %s30
      %33 = dma.vmem_to_hbm [thread:$0]  %s31, 32, %s1, [#allocation4]
    $region13: #{tpu_custom_call.1} parent=1 // pred_fallthru
      _
    // Predicated region
    $region14: #{tpu_custom_call.1} parent=1 // pred_check
      _
    $region15: #{tpu_custom_call.1} parent=1 // pred_check_branch
      %35 = sbr.rel (0) target = $region17
    $region16: #{tpu_custom_call.1} parent=1 // pred_region
      %36 = dma.done [#allocation4], 32
    $region17: #{tpu_custom_call.1} parent=1 // pred_fallthru
      _
    %37 = vsyncpa [#allocation3], 1
    %38 = vsyncpa [#allocation4], 1

</llo_original>
